<compile_context>
chip_gen: v7x
topology: tpu7x:2x2x1
jax: 0.10.0
libtpu: 0.0.40
codegen_flags: <defaults>
</compile_context>

<pallas_src>
import math

import jax
import jax.numpy as jnp
from jax.experimental import pallas as pl
from jax.experimental.pallas import tpu as pltpu


# ----------------------------- Pallas kernel ---------------------------------

def data_embedding_kernel(x_ref, w_ref, pe_ref, o_ref):
    # x_ref : (Bt, L, c_in)  raw input block (no pre-shifted copies in HBM)
    # w_ref : (3, c_in, d)   conv taps; tap k multiplies x[(t + k - 1) mod L]
    # pe_ref: (L, d)         positional embedding (broadcast over batch)
    # o_ref : (Bt, L, d)
    bt, L, _ = x_ref.shape
    w_prev = w_ref[0]
    w_mid = w_ref[1]
    w_next = w_ref[2]
    pe = pe_ref[...]

    # Circular +/-1 shifts expressed as L x L permutation matmuls.  Built once per
    # grid step from 2-D iota; MXU cost 2*L*L*c_in flops per batch is negligible
    # next to the HBM-bound output write, and it avoids any concat/roll relayout.
    row = jax.lax.broadcasted_iota(jnp.int32, (L, L), 0)
    col = jax.lax.broadcasted_iota(jnp.int32, (L, L), 1)
    p_prev = ((col + 1 == row) | ((row == 0) & (col == L - 1))).astype(jnp.float32)
    p_next = ((col == row + 1) | ((row == L - 1) & (col == 0))).astype(jnp.float32)

    def body(b, carry):
        x = x_ref[b]                                                      # (L, c_in)
        x_prev = jnp.dot(p_prev, x, preferred_element_type=jnp.float32)  # x[(t-1) mod L]
        x_next = jnp.dot(p_next, x, preferred_element_type=jnp.float32)  # x[(t+1) mod L]
        y = jnp.dot(x, w_mid, preferred_element_type=jnp.float32)
        y = y + jnp.dot(x_prev, w_prev, preferred_element_type=jnp.float32)
        y = y + jnp.dot(x_next, w_next, preferred_element_type=jnp.float32)
        o_ref[b] = (y + pe).astype(o_ref.dtype)   # dropout: eval-mode identity
        return carry

    jax.lax.fori_loop(0, bt, body, 0)


# ----------------------------- wrappers ---------------------------------------

def _round_up(x, m):
    return (x + m - 1) // m * m


def _vmem_budgets():
    """Generation-aware (tile budget for Bt selection, vmem_limit_bytes)."""
    cap = 64 * 1024 * 1024
    try:
        cap = int(getattr(pltpu.get_tpu_info(), "vmem_capacity_bytes", cap))
    except Exception:
        pass
    if cap >= 128 * 1024 * 1024:                     # v5e / v6e: 128 MiB per core
        return 48 * 1024 * 1024, 64 * 1024 * 1024
    return 24 * 1024 * 1024, 32 * 1024 * 1024        # v7x: 64 MiB per core


def _choose_batch_block(B, L, c_in, d_model, vmem_budget_bytes,
                        min_grid_steps=4, min_rows_per_step=512, bytes_per=4):
    """Largest Bt whose double-buffered (lane/sublane-padded) in+out tiles fit the
    budget, preferring >=min_grid_steps grid steps (pipeline overlap, 2 TCs on v7x)
    while keeping each step's DMA reasonably large."""
    lane, sub = 128, 8
    Lp = _round_up(L, sub)
    # per-batch VMEM footprint, accounting for lane padding of the small c_in dim
    per_batch = 2 * Lp * (_round_up(c_in, lane) + _round_up(d_model, lane)) * bytes_per
    # double-buffered constant blocks (w taps + pe)
    const = 2 * (3 * _round_up(c_in, sub) * _round_up(d_model, lane)
                 + Lp * _round_up(d_model, lane)) * bytes_per
    avail = max(vmem_budget_bytes - const, per_batch)
    bt_cap = max(1, avail // per_batch)
    bt = max(1, min(bt_cap, pl.cdiv(B, min_grid_steps)))
    if bt * L < min_rows_per_step:   # don't let per-step DMAs get tiny
        bt = max(bt, min(bt_cap, pl.cdiv(min_rows_per_step, L), B))
    return int(min(bt, B))


def pack_data_embedding_params(conv_weight, pe_table, seq_len):
    """One-time packing (hoisted out of the hot path).

    conv_weight: (d_model, c_in, 3) torch Conv1d layout; tap k hits x[(t+k-1) mod L]
    pe_table   : (max_len, d_model)
    Returns (w_taps (3, c_in, d_model), pe (seq_len, d_model)).
    """
    w_taps = jnp.transpose(conv_weight, (2, 1, 0)).astype(jnp.float32)
    pe = pe_table[:seq_len].astype(jnp.float32)
    return w_taps, pe


def data_embedding(x, w_taps, pe, out_dtype=None):
    """x: (B, L, c_in). w_taps: (3, c_in, d_model). pe: (L, d_model).
    out_dtype: optionally jnp.bfloat16 to halve the dominant output HBM traffic."""
    B, L, c_in = x.shape
    k, c_in_w, d_model = w_taps.shape
    assert k == 3 and c_in_w == c_in and pe.shape == (L, d_model)
    out_dtype = x.dtype if out_dtype is None else out_dtype

    budget, vmem_limit = _vmem_budgets()
    bt = _choose_batch_block(B, L, c_in, d_model, budget)
    grid_b = pl.cdiv(B, bt)
    b_pad = grid_b * bt

    x_in = x.astype(jnp.float32)
    if b_pad != B:                      # handle prime-ish B: pad instead of bt=1 collapse
        x_in = jnp.pad(x_in, ((0, b_pad - B), (0, 0), (0, 0)))

    flops = 2 * b_pad * L * (3 * c_in) * d_model
    bytes_accessed = 4 * (b_pad * L * c_in + 3 * c_in * d_model + L * d_model) \
        + jnp.dtype(out_dtype).itemsize * b_pad * L * d_model

    out = pl.pallas_call(
        data_embedding_kernel,
        out_shape=jax.ShapeDtypeStruct((b_pad, L, d_model), out_dtype),
        grid=(grid_b,),
        in_specs=[
            pl.BlockSpec((bt, L, c_in), lambda b: (b, 0, 0)),
            pl.BlockSpec((3, c_in, d_model), lambda b: (0, 0, 0)),  # constant index
            pl.BlockSpec((L, d_model), lambda b: (0, 0)),           # constant index
        ],
        out_specs=pl.BlockSpec((bt, L, d_model), lambda b: (b, 0, 0)),
        compiler_params=pltpu.CompilerParams(
            dimension_semantics=("parallel",),
            vmem_limit_bytes=vmem_limit,
        ),
        cost_estimate=pl.CostEstimate(
            flops=int(flops), transcendentals=0, bytes_accessed=int(bytes_accessed)),
    )(x_in, w_taps.astype(jnp.float32), pe.astype(jnp.float32))

    if b_pad != B:
        out = out[:B]
    return out


# ----------------------------- parameter init / reference ---------------------

def make_positional_table(d_model, max_len=5000):
    position = jnp.arange(0, max_len, dtype=jnp.float32)[:, None]
    div_term = jnp.exp(jnp.arange(0, d_model, 2, dtype=jnp.float32)
                       * (-(math.log(10000.0) / d_model)))
    pe = jnp.zeros((max_len, d_model), dtype=jnp.float32)
    pe = pe.at[:, 0::2].set(jnp.sin(position * div_term))
    pe = pe.at[:, 1::2].set(jnp.cos(position * div_term))
    return pe


def init_conv_weight(key, c_in, d_model, ksize=3):
    # kaiming_normal_(mode='fan_in', nonlinearity='leaky_relu', a=0.01 default)
    fan_in = c_in * ksize
    gain = math.sqrt(2.0 / (1.0 + 0.01 ** 2))
    std = gain / math.sqrt(fan_in)
    return jax.random.normal(key, (d_model, c_in, ksize), dtype=jnp.float32) * std


def reference(x, conv_weight, pe_table):
    # pure-JAX reference (circular conv1d k=3 pad=1, no bias, + positional embedding)
    B, L, c_in = x.shape
    x_prev = jnp.roll(x, 1, axis=1)
    x_next = jnp.roll(x, -1, axis=1)
    w = jnp.transpose(conv_weight, (2, 1, 0))  # (3, c_in, d_model)
    y = x_prev @ w[0] + x @ w[1] + x_next @ w[2]
    return y + pe_table[None, :L, :]


# ----------------------------- main -------------------------------------------

if __name__ == "__main__":
    B, L, c_in, d_model = 2, 16, 8, 32
    key = jax.random.PRNGKey(0)
    kx, kw = jax.random.split(key)
    x = jax.random.normal(kx, (B, L, c_in), dtype=jnp.float32)
    conv_weight = init_conv_weight(kw, c_in, d_model)
    pe_table = make_positional_table(d_model)

    # pack once (outside the hot path), then run the fused kernel
    w_taps, pe = pack_data_embedding_params(conv_weight, pe_table, L)
    out = data_embedding(x, w_taps, pe)
    out = jax.block_until_ready(out)

    ref = reference(x, conv_weight, pe_table)
    assert out.shape == (B, L, d_model)
    err = float(jnp.max(jnp.abs(out - ref)))
    assert jnp.allclose(out, ref, atol=1e-4, rtol=1e-4), err
    print("KERNEL_OK")
</pallas_src>

<mosaic_0001>
module attributes {stable_mosaic.version = 11 : i64} {
  func.func @data_embedding_kernel(%arg0: i32, %arg1: memref<2x16x8xf32, #tpu.memory_space<vmem>>, %arg2: memref<3x8x32xf32, #tpu.memory_space<vmem>>, %arg3: memref<16x32xf32, #tpu.memory_space<vmem>>, %arg4: memref<2x16x32xf32, #tpu.memory_space<vmem>>) attributes {dimension_semantics = [#tpu.dimension_semantics<parallel>], iteration_bounds = array<i64: 1>, scalar_prefetch = 0 : i64, scratch_operands = 0 : i64, tpu.core_type = #tpu.core_type<tc>, window_params = [{transform_indices = @transform_0, window_bounds = array<i64: 2, 16, 8>}, {pipeline_mode = #tpu.pipeline_mode<synchronous>, transform_indices = @transform_1, window_bounds = array<i64: 3, 8, 32>}, {pipeline_mode = #tpu.pipeline_mode<synchronous>, transform_indices = @transform_2, window_bounds = array<i64: 16, 32>}, {transform_indices = @transform_3, window_bounds = array<i64: 2, 16, 32>}]} {
    %c0 = arith.constant 0 : index
    %c0_0 = arith.constant 0 : index
    %c0_1 = arith.constant 0 : index
    %0 = vector.load %arg2[%c0, %c0_0, %c0_1] : memref<3x8x32xf32, #tpu.memory_space<vmem>>, vector<1x8x32xf32>
    %1 = vector.shape_cast %0 : vector<1x8x32xf32> to vector<8x32xf32>
    %c1 = arith.constant 1 : index
    %c0_2 = arith.constant 0 : index
    %c0_3 = arith.constant 0 : index
    %2 = vector.load %arg2[%c1, %c0_2, %c0_3] : memref<3x8x32xf32, #tpu.memory_space<vmem>>, vector<1x8x32xf32>
    %3 = vector.shape_cast %2 : vector<1x8x32xf32> to vector<8x32xf32>
    %c2 = arith.constant 2 : index
    %c0_4 = arith.constant 0 : index
    %c0_5 = arith.constant 0 : index
    %4 = vector.load %arg2[%c2, %c0_4, %c0_5] : memref<3x8x32xf32, #tpu.memory_space<vmem>>, vector<1x8x32xf32>
    %5 = vector.shape_cast %4 : vector<1x8x32xf32> to vector<8x32xf32>
    %c0_6 = arith.constant 0 : index
    %c0_7 = arith.constant 0 : index
    %6 = vector.load %arg3[%c0_6, %c0_7] : memref<16x32xf32, #tpu.memory_space<vmem>>, vector<16x32xf32>
    %7 = tpu.iota {dimensions = array<i32: 0>} : vector<16x16xi32>
    %8 = tpu.iota {dimensions = array<i32: 1>} : vector<16x16xi32>
    %c1_i32 = arith.constant 1 : i32
    %9 = vector.broadcast %c1_i32 : i32 to vector<16x16xi32>
    %10 = arith.addi %8, %9 : vector<16x16xi32>
    %11 = arith.cmpi eq, %10, %7 : vector<16x16xi32>
    %c0_i32 = arith.constant 0 : i32
    %12 = vector.broadcast %c0_i32 : i32 to vector<16x16xi32>
    %13 = arith.cmpi eq, %7, %12 : vector<16x16xi32>
    %c15_i32 = arith.constant 15 : i32
    %14 = vector.broadcast %c15_i32 : i32 to vector<16x16xi32>
    %15 = arith.cmpi eq, %8, %14 : vector<16x16xi32>
    %16 = arith.andi %13, %15 : vector<16x16xi1>
    %17 = arith.ori %11, %16 : vector<16x16xi1>
    %18 = arith.extui %17 : vector<16x16xi1> to vector<16x16xi32>
    %19 = arith.sitofp %18 : vector<16x16xi32> to vector<16x16xf32>
    %c1_i32_8 = arith.constant 1 : i32
    %20 = vector.broadcast %c1_i32_8 : i32 to vector<16x16xi32>
    %21 = arith.addi %7, %20 : vector<16x16xi32>
    %22 = arith.cmpi eq, %8, %21 : vector<16x16xi32>
    %c15_i32_9 = arith.constant 15 : i32
    %23 = vector.broadcast %c15_i32_9 : i32 to vector<16x16xi32>
    %24 = arith.cmpi eq, %7, %23 : vector<16x16xi32>
    %c0_i32_10 = arith.constant 0 : i32
    %25 = vector.broadcast %c0_i32_10 : i32 to vector<16x16xi32>
    %26 = arith.cmpi eq, %8, %25 : vector<16x16xi32>
    %27 = arith.andi %24, %26 : vector<16x16xi1>
    %28 = arith.ori %22, %27 : vector<16x16xi1>
    %29 = arith.extui %28 : vector<16x16xi1> to vector<16x16xi32>
    %30 = arith.sitofp %29 : vector<16x16xi32> to vector<16x16xf32>
    %c0_i32_11 = arith.constant 0 : i32
    %c2_i32 = arith.constant 2 : i32
    %31 = arith.addi %c0_i32_11, %c2_i32 : i32
    %c1_i32_12 = arith.constant 1 : i32
    scf.for %arg5 = %c0_i32_11 to %31 step %c1_i32_12  : i32 {
      %32 = arith.index_cast %arg5 : i32 to index
      %c0_14 = arith.constant 0 : index
      %c0_15 = arith.constant 0 : index
      %33 = vector.load %arg1[%32, %c0_14, %c0_15] : memref<2x16x8xf32, #tpu.memory_space<vmem>>, vector<1x16x8xf32>
      %34 = vector.shape_cast %33 : vector<1x16x8xf32> to vector<16x8xf32>
      %cst = arith.constant dense<0.000000e+00> : vector<16x8xf32>
      %35 = tpu.matmul %19, %34, %cst {dimension_numbers = #tpu.dot_dimension_numbers<[1], [0], [0], [1], [0, 0, 1, 1], [], []>} : vector<16x16xf32>, vector<16x8xf32>, vector<16x8xf32> -> vector<16x8xf32>
      %cst_16 = arith.constant dense<0.000000e+00> : vector<16x8xf32>
      %36 = tpu.matmul %30, %34, %cst_16 {dimension_numbers = #tpu.dot_dimension_numbers<[1], [0], [0], [1], [0, 0, 1, 1], [], []>} : vector<16x16xf32>, vector<16x8xf32>, vector<16x8xf32> -> vector<16x8xf32>
      %cst_17 = arith.constant dense<0.000000e+00> : vector<16x32xf32>
      %37 = tpu.matmul %34, %3, %cst_17 {dimension_numbers = #tpu.dot_dimension_numbers<[1], [0], [0], [1], [0, 0, 1, 1], [], []>} : vector<16x8xf32>, vector<8x32xf32>, vector<16x32xf32> -> vector<16x32xf32>
      %cst_18 = arith.constant dense<0.000000e+00> : vector<16x32xf32>
      %38 = tpu.matmul %35, %1, %cst_18 {dimension_numbers = #tpu.dot_dimension_numbers<[1], [0], [0], [1], [0, 0, 1, 1], [], []>} : vector<16x8xf32>, vector<8x32xf32>, vector<16x32xf32> -> vector<16x32xf32>
      %39 = arith.addf %37, %38 : vector<16x32xf32>
      %cst_19 = arith.constant dense<0.000000e+00> : vector<16x32xf32>
      %40 = tpu.matmul %36, %5, %cst_19 {dimension_numbers = #tpu.dot_dimension_numbers<[1], [0], [0], [1], [0, 0, 1, 1], [], []>} : vector<16x8xf32>, vector<8x32xf32>, vector<16x32xf32> -> vector<16x32xf32>
      %41 = arith.addf %39, %40 : vector<16x32xf32>
      %42 = arith.addf %41, %6 : vector<16x32xf32>
      %43 = arith.index_cast %arg5 : i32 to index
      %c0_20 = arith.constant 0 : index
      %c0_21 = arith.constant 0 : index
      %44 = vector.load %arg4[%43, %c0_20, %c0_21] : memref<2x16x32xf32, #tpu.memory_space<vmem>>, vector<1x16x32xf32>
      %45 = vector.shape_cast %44 : vector<1x16x32xf32> to vector<16x32xf32>
      %46 = vector.shape_cast %42 : vector<16x32xf32> to vector<1x16x32xf32>
      tpu.vector_store %arg4[%43, %c0_20, %c0_21], %46 {strides = array<i32>} : memref<2x16x32xf32, #tpu.memory_space<vmem>>, vector<1x16x32xf32>,
    }
    %c2_i32_13 = arith.constant 2 : i32
    return
  }
  func.func @transform_0(%arg0: i32) -> (i32, i32, i32) {
    %c0_i32 = arith.constant 0 : i32
    %c0_i32_0 = arith.constant 0 : i32
    %c0_i32_1 = arith.constant 0 : i32
    return %arg0, %c0_i32, %c0_i32_0 : i32, i32, i32
  }
  func.func @transform_1(%arg0: i32) -> (i32, i32, i32) {
    %c0_i32 = arith.constant 0 : i32
    %c0_i32_0 = arith.constant 0 : i32
    %c0_i32_1 = arith.constant 0 : i32
    %c0_i32_2 = arith.constant 0 : i32
    return %c0_i32, %c0_i32_0, %c0_i32_1 : i32, i32, i32
  }
  func.func @transform_2(%arg0: i32) -> (i32, i32) {
    %c0_i32 = arith.constant 0 : i32
    %c0_i32_0 = arith.constant 0 : i32
    %c0_i32_1 = arith.constant 0 : i32
    return %c0_i32, %c0_i32_0 : i32, i32
  }
  func.func @transform_3(%arg0: i32) -> (i32, i32, i32) {
    %c0_i32 = arith.constant 0 : i32
    %c0_i32_0 = arith.constant 0 : i32
    %c0_i32_1 = arith.constant 0 : i32
    return %arg0, %c0_i32, %c0_i32_0 : i32, i32, i32
  }
}

</mosaic_0001>

<llo_original>
// kernel: tpu_custom_call.1
$region0: #{tpu_custom_call.1}
  #allocation0 [shape = 'u32[]', space=smem, size = 0x4, offset = 0x4, fixed_abs, tag = 'smem constant byte address 0x4 - core index']
  #allocation1 [shape = 'u32[144,128]{1,0:T(1,128)}', space=vmem, size = 0x12000, scoped, tag = 'internal scratch']
  %s0 = inlined_call_operand.vmem [shape: f32[2,16,8], index: 0, kind: input, shape index: {}]
  %s1 = inlined_call_operand.vmem [shape: f32[3,8,32], index: 1, kind: input, shape index: {}]
  %s2 = inlined_call_operand.vmem [shape: f32[16,32], index: 2, kind: input, shape index: {}]
  %s3 = inlined_call_operand.hbm [shape: f32[2,16,32], index: 3, kind: output, shape index: {}]
  %s4 = sld [smem:[#allocation0]]
  $region29: #{tpu_custom_call.1} parent=0
    _
  %s6 = ssub.s32 1, %s4
  %s7 = scalar_select 0, %s6, %s4
  $region1: #{tpu_custom_call.1} parent=0
    #allocation2 [shape = 'u8[16384]{0}', space=vmem, size = 0x4000, scoped, tag = 'output window, operand 0, single buffered']
    #allocation3 [shape = 's32[1]{0}', space=sflag, size = 0x4, scoped, tag = 'scoped memory for tpu_custom_call.1']
    %8 = vsyncpa [#allocation3], 0
    // Predicated region
    $region2: #{tpu_custom_call.1} parent=1 // pred_check
      _
    $region3: #{tpu_custom_call.1} parent=1 // pred_check_branch
      %10 = sbr.rel (0) target = $region5
    $region4: #{tpu_custom_call.1} parent=1 // pred_region
      _
    $region5: #{tpu_custom_call.1} parent=1 // pred_fallthru
      _
    // Predicated region
    $region6: #{tpu_custom_call.1} parent=1 // pred_check
      _
    $region7: #{tpu_custom_call.1} parent=1 // pred_check_branch
      %12 = sbr.rel (0) target = $region9
    $region8: #{tpu_custom_call.1} parent=1 // pred_region
      _
    $region9: #{tpu_custom_call.1} parent=1 // pred_fallthru
      _
    // Predicated region
    $region10: #{tpu_custom_call.1} parent=1 // pred_check
      _
    $region11: #{tpu_custom_call.1} parent=1 // pred_check_branch
      %14 = sbr.rel (0) target = $region13
    $region12: #{tpu_custom_call.1} parent=1 // pred_region
      _
    $region13: #{tpu_custom_call.1} parent=1 // pred_fallthru
      _
    %v15 = vld [vmem:[%s1] sm:$0xff]
    %s16 = scalar_lea.vmem %s1, 8
    %v17 = vld [vmem:[%s16] sm:$0xff]
    %s18 = scalar_lea.vmem %s1, 16
    %v19 = vld [vmem:[%s18] sm:$0xff]
    %v20 = vld [vmem:[%s2] sm:$0xff]
    %v21 = vld [vmem:[%s2 + $0x8] sm:$0xff]
    %v22 = vlaneseq
    %v23 = vshrl.u32 %v22, 7
    %v24 = vadd.s32 %v23, 8
    %v25 = vlaneseq
    %v26 = vand.u32 %v25, 127
    %v27 = vadd.s32 %v26, 1
    %vm28 = vcmp.eq.s32.totalorder %v27, %v23
    %vm29 = vcmp.eq.s32.totalorder %v27, %v24
    %vm30 = vcmp.eq.s32.totalorder %v23, 0
    %vm31 = vcmp.eq.s32.totalorder %v24, 0
    %vm32 = vcmp.eq.s32.totalorder %v26, 15
    %vm33 = vmand %vm30, %vm32
    %vm34 = vmand %vm31, %vm32
    %vm35 = vmor %vm28, %vm33
    %vm36 = vmor %vm29, %vm34
    %v37 = vsel %vm35, 1, 0
    %v38 = vsel %vm36, 1, 0
    %v39 = vcvt.s32.f32 %v37
    %v40 = vcvt.s32.f32 %v38
    %v41 = vadd.s32 %v23, 1
    %v42 = vadd.s32 %v24, 1
    %vm43 = vcmp.eq.s32.totalorder %v26, %v41
    %vm44 = vcmp.eq.s32.totalorder %v26, %v42
    %vm45 = vcmp.eq.s32.totalorder %v23, 15
    %vm46 = vcmp.eq.s32.totalorder %v24, 15
    %vm47 = vcmp.eq.s32.totalorder %v26, 0
    %vm48 = vmand %vm45, %vm47
    %vm49 = vmand %vm46, %vm47
    %vm50 = vmor %vm43, %vm48
    %vm51 = vmor %vm44, %vm49
    %v52 = vsel %vm50, 1, 0
    %v53 = vsel %vm51, 1, 0
    %v54 = vcvt.s32.f32 %v52
    %v55 = vcvt.s32.f32 %v53
    loop: start=0, step=1, limit=2
    $region14: #{tpu_custom_call.1} parent=1 // loop_pre_header
      _
    $region15: #{tpu_custom_call.1} parent=1 // loop_header
      %s57 = sphi 0, %s61
      %p58 = scmp.ge.s32.totalorder %s57, 2
    $region16: #{tpu_custom_call.1} parent=1 // loop_header_branch
      %60 = sbr.rel (%p58) target = $region20
    $region17: #{tpu_custom_call.1} parent=1 // loop_body
      %s62 = smul.u32 %s57, 16
      %s63 = scalar_lea.vmem %s0, %s62
      %v64 = vld [vmem:[%s63] sm:$0xff]
      %v65 = vld [vmem:[%s63 + $0x8] sm:$0xff]
      %vm66 = vcmask 130048
      %v68 = vsel %vm66, %v39, 0
      %v71 = vsel %vm66, %v40, 0
      %73 = vmatprep.subr.mxu0 0.0
      %74 = vmatpush1.msra.mxu0 %v64
      %75 = vmatprep.subr.mxu0 0.0
      %76 = vmatpush1.msra.mxu0 %v65
      %77 = vmatprep.subr.mxu0 0.0
      %78 = vmatpush1.msra.mxu0 0.0
      %79 = vmatprep.subr.mxu0 0.0
      %80 = vmatpush1.msra.mxu0 0.0
      %81 = vmatprep.subr.mxu0 0.0
      %82 = vmatpush1.msra.mxu0 0.0
      %83 = vmatprep.subr.mxu0 0.0
      %84 = vmatpush1.msra.mxu0 0.0
      %85 = vmatprep.subr.mxu0 0.0
      %86 = vmatpush1.msra.mxu0 0.0
      %87 = vmatprep.subr.mxu0 0.0
      %88 = vmatpush1.msra.mxu0 0.0
      %89 = vmatprep.subr.mxu0 0.0
      %90 = vmatpush1.msra.mxu0 0.0
      %91 = vmatprep.subr.mxu0 0.0
      %92 = vmatpush1.msra.mxu0 0.0
      %93 = vmatprep.subr.mxu0 0.0
      %94 = vmatpush1.msra.mxu0 0.0
      %95 = vmatprep.subr.mxu0 0.0
      %96 = vmatpush1.msra.mxu0 0.0
      %97 = vmatprep.subr.mxu0 0.0
      %98 = vmatpush1.msra.mxu0 0.0
      %99 = vmatprep.subr.mxu0 0.0
      %100 = vmatpush1.msra.mxu0 0.0
      %101 = vmatprep.subr.mxu0 0.0
      %102 = vmatpush1.msra.mxu0 0.0
      %103 = vmatprep.subr.mxu0 0.0
      %104 = vmatpush1.msra.mxu0 0.0
      %105 = vmatprep.subr.mxu0 0.0
      %106 = vmatpush1.msra.mxu0 0.0
      %107 = vmatprep.subr.mxu0 0.0
      %108 = vmatpush1.msra.mxu0 0.0
      %109 = vmatprep.subr.mxu0 0.0
      %110 = vmatpush1.msra.mxu0 0.0
      %111 = vmatprep.subr.mxu0 0.0
      %112 = vmatpush1.msra.mxu0 0.0
      %113 = vmatprep.subr.mxu0 0.0
      %114 = vmatpush1.msra.mxu0 0.0
      %115 = vmatprep.subr.mxu0 0.0
      %116 = vmatpush1.msra.mxu0 0.0
      %117 = vmatprep.subr.mxu0 0.0
      %118 = vmatpush1.msra.mxu0 0.0
      %119 = vmatprep.subr.mxu0 0.0
      %120 = vmatpush1.msra.mxu0 0.0
      %121 = vmatprep.subr.mxu0 0.0
      %122 = vmatpush1.msra.mxu0 0.0
      %123 = vmatprep.subr.mxu0 0.0
      %124 = vmatpush1.msra.mxu0 0.0
      %125 = vmatprep.subr.mxu0 0.0
      %126 = vmatpush1.msra.mxu0 0.0
      %127 = vmatprep.subr.mxu0 0.0
      %128 = vmatpush1.msra.mxu0 0.0
      %129 = vmatprep.subr.mxu0 0.0
      %130 = vmatpush1.msra.mxu0 0.0
      %131 = vmatprep.subr.mxu0 0.0
      %132 = vmatpush1.msra.mxu0 0.0
      %133 = vmatprep.subr.mxu0 0.0
      %134 = vmatpush1.msra.mxu0 0.0
      %135 = vmatprep.subr.mxu0 0.0
      %136 = vmatpush1.msra.mxu0 0.0
      %137 = vmatprep.mubr.f32.mxu0 0.0
      %138 = vmatmul.mubr.f32.gmra.mrb[0].mxu0 %v68
      %v139 = vpop.f32.mrb[0].mxu0
      %v140 = vadd.f32 0.0, %v139
      %v141 = vpop.f32.mrb[0].mxu0
      %142 = vmatprep.mubr.f32.mxu0 0.0
      %143 = vmatmul.mubr.f32.gmra.mrb[0].mxu0 %v71
      %v144 = vpop.f32.mrb[0].mxu0
      %v145 = vadd.f32 0.0, %v144
      %v146 = vpop.f32.mrb[0].mxu0
      %147 = vdwg.mxu0
      %v149 = vsel %vm66, %v54, 0
      %v152 = vsel %vm66, %v55, 0
      %154 = vmatprep.subr.mxu0 0.0
      %155 = vmatpush1.msra.mxu0 %v64
      %156 = vmatprep.subr.mxu0 0.0
      %157 = vmatpush1.msra.mxu0 %v65
      %158 = vmatprep.subr.mxu0 0.0
      %159 = vmatpush1.msra.mxu0 0.0
      %160 = vmatprep.subr.mxu0 0.0
      %161 = vmatpush1.msra.mxu0 0.0
      %162 = vmatprep.subr.mxu0 0.0
      %163 = vmatpush1.msra.mxu0 0.0
      %164 = vmatprep.subr.mxu0 0.0
      %165 = vmatpush1.msra.mxu0 0.0
      %166 = vmatprep.subr.mxu0 0.0
      %167 = vmatpush1.msra.mxu0 0.0
      %168 = vmatprep.subr.mxu0 0.0
      %169 = vmatpush1.msra.mxu0 0.0
      %170 = vmatprep.subr.mxu0 0.0
      %171 = vmatpush1.msra.mxu0 0.0
      %172 = vmatprep.subr.mxu0 0.0
      %173 = vmatpush1.msra.mxu0 0.0
      %174 = vmatprep.subr.mxu0 0.0
      %175 = vmatpush1.msra.mxu0 0.0
      %176 = vmatprep.subr.mxu0 0.0
      %177 = vmatpush1.msra.mxu0 0.0
      %178 = vmatprep.subr.mxu0 0.0
      %179 = vmatpush1.msra.mxu0 0.0
      %180 = vmatprep.subr.mxu0 0.0
      %181 = vmatpush1.msra.mxu0 0.0
      %182 = vmatprep.subr.mxu0 0.0
      %183 = vmatpush1.msra.mxu0 0.0
      %184 = vmatprep.subr.mxu0 0.0
      %185 = vmatpush1.msra.mxu0 0.0
      %186 = vmatprep.subr.mxu0 0.0
      %187 = vmatpush1.msra.mxu0 0.0
      %188 = vmatprep.subr.mxu0 0.0
      %189 = vmatpush1.msra.mxu0 0.0
      %190 = vmatprep.subr.mxu0 0.0
      %191 = vmatpush1.msra.mxu0 0.0
      %192 = vmatprep.subr.mxu0 0.0
      %193 = vmatpush1.msra.mxu0 0.0
      %194 = vmatprep.subr.mxu0 0.0
      %195 = vmatpush1.msra.mxu0 0.0
      %196 = vmatprep.subr.mxu0 0.0
      %197 = vmatpush1.msra.mxu0 0.0
      %198 = vmatprep.subr.mxu0 0.0
      %199 = vmatpush1.msra.mxu0 0.0
      %200 = vmatprep.subr.mxu0 0.0
      %201 = vmatpush1.msra.mxu0 0.0
      %202 = vmatprep.subr.mxu0 0.0
      %203 = vmatpush1.msra.mxu0 0.0
      %204 = vmatprep.subr.mxu0 0.0
      %205 = vmatpush1.msra.mxu0 0.0
      %206 = vmatprep.subr.mxu0 0.0
      %207 = vmatpush1.msra.mxu0 0.0
      %208 = vmatprep.subr.mxu0 0.0
      %209 = vmatpush1.msra.mxu0 0.0
      %210 = vmatprep.subr.mxu0 0.0
      %211 = vmatpush1.msra.mxu0 0.0
      %212 = vmatprep.subr.mxu0 0.0
      %213 = vmatpush1.msra.mxu0 0.0
      %214 = vmatprep.subr.mxu0 0.0
      %215 = vmatpush1.msra.mxu0 0.0
      %216 = vmatprep.subr.mxu0 0.0
      %217 = vmatpush1.msra.mxu0 0.0
      %218 = vmatprep.mubr.f32.mxu0 0.0
      %219 = vmatmul.mubr.f32.gmra.mrb[0].mxu0 %v149
      %v220 = vpop.f32.mrb[0].mxu0
      %v221 = vadd.f32 0.0, %v220
      %v222 = vpop.f32.mrb[0].mxu0
      %223 = vmatprep.mubr.f32.mxu0 0.0
      %224 = vmatmul.mubr.f32.gmra.mrb[0].mxu0 %v152
      %v225 = vpop.f32.mrb[0].mxu0
      %v226 = vadd.f32 0.0, %v225
      %v227 = vpop.f32.mrb[0].mxu0
      %228 = vdwg.mxu0
      %vm229 = vcmask 64512
      %v231 = vsel %vm229, %v140, 0
      %v234 = vsel %vm229, %v145, 0
      %236 = vmatprep.subr.mxu0 0.0
      %237 = vmatpush1.msra.mxu0 %v15
      %238 = vmatprep.subr.mxu0 0.0
      %239 = vmatpush1.msra.mxu0 0.0
      %240 = vmatprep.subr.mxu0 0.0
      %241 = vmatpush1.msra.mxu0 0.0
      %242 = vmatprep.subr.mxu0 0.0
      %243 = vmatpush1.msra.mxu0 0.0
      %244 = vmatprep.subr.mxu0 0.0
      %245 = vmatpush1.msra.mxu0 0.0
      %246 = vmatprep.subr.mxu0 0.0
      %247 = vmatpush1.msra.mxu0 0.0
      %248 = vmatprep.subr.mxu0 0.0
      %249 = vmatpush1.msra.mxu0 0.0
      %250 = vmatprep.subr.mxu0 0.0
      %251 = vmatpush1.msra.mxu0 0.0
      %252 = vmatprep.subr.mxu0 0.0
      %253 = vmatpush1.msra.mxu0 0.0
      %254 = vmatprep.subr.mxu0 0.0
      %255 = vmatpush1.msra.mxu0 0.0
      %256 = vmatprep.subr.mxu0 0.0
      %257 = vmatpush1.msra.mxu0 0.0
      %258 = vmatprep.subr.mxu0 0.0
      %259 = vmatpush1.msra.mxu0 0.0
      %260 = vmatprep.subr.mxu0 0.0
      %261 = vmatpush1.msra.mxu0 0.0
      %262 = vmatprep.subr.mxu0 0.0
      %263 = vmatpush1.msra.mxu0 0.0
      %264 = vmatprep.subr.mxu0 0.0
      %265 = vmatpush1.msra.mxu0 0.0
      %266 = vmatprep.subr.mxu0 0.0
      %267 = vmatpush1.msra.mxu0 0.0
      %268 = vmatprep.subr.mxu0 0.0
      %269 = vmatpush1.msra.mxu0 0.0
      %270 = vmatprep.subr.mxu0 0.0
      %271 = vmatpush1.msra.mxu0 0.0
      %272 = vmatprep.subr.mxu0 0.0
      %273 = vmatpush1.msra.mxu0 0.0
      %274 = vmatprep.subr.mxu0 0.0
      %275 = vmatpush1.msra.mxu0 0.0
      %276 = vmatprep.subr.mxu0 0.0
      %277 = vmatpush1.msra.mxu0 0.0
      %278 = vmatprep.subr.mxu0 0.0
      %279 = vmatpush1.msra.mxu0 0.0
      %280 = vmatprep.subr.mxu0 0.0
      %281 = vmatpush1.msra.mxu0 0.0
      %282 = vmatprep.subr.mxu0 0.0
      %283 = vmatpush1.msra.mxu0 0.0
      %284 = vmatprep.subr.mxu0 0.0
      %285 = vmatpush1.msra.mxu0 0.0
      %286 = vmatprep.subr.mxu0 0.0
      %287 = vmatpush1.msra.mxu0 0.0
      %288 = vmatprep.subr.mxu0 0.0
      %289 = vmatpush1.msra.mxu0 0.0
      %290 = vmatprep.subr.mxu0 0.0
      %291 = vmatpush1.msra.mxu0 0.0
      %292 = vmatprep.subr.mxu0 0.0
      %293 = vmatpush1.msra.mxu0 0.0
      %294 = vmatprep.subr.mxu0 0.0
      %295 = vmatpush1.msra.mxu0 0.0
      %296 = vmatprep.subr.mxu0 0.0
      %297 = vmatpush1.msra.mxu0 0.0
      %298 = vmatprep.subr.mxu0 0.0
      %299 = vmatpush1.msra.mxu0 0.0
      %300 = vmatprep.mubr.f32.mxu0 0.0
      %301 = vmatmul.mubr.f32.gmra.mrb[0].mxu0 %v231
      %v302 = vpop.f32.mrb[0].mxu0
      %v303 = vadd.f32 0.0, %v302
      %v304 = vpop.f32.mrb[0].mxu0
      %305 = vmatprep.mubr.f32.mxu0 0.0
      %306 = vmatmul.mubr.f32.gmra.mrb[0].mxu0 %v234
      %v307 = vpop.f32.mrb[0].mxu0
      %v308 = vadd.f32 0.0, %v307
      %v309 = vpop.f32.mrb[0].mxu0
      %310 = vdwg.mxu0
      %v312 = vsel %vm229, %v64, 0
      %v315 = vsel %vm229, %v65, 0
      %317 = vmatprep.subr.mxu0 0.0
      %318 = vmatpush1.msra.mxu0 %v17
      %319 = vmatprep.subr.mxu0 0.0
      %320 = vmatpush1.msra.mxu0 0.0
      %321 = vmatprep.subr.mxu0 0.0
      %322 = vmatpush1.msra.mxu0 0.0
      %323 = vmatprep.subr.mxu0 0.0
      %324 = vmatpush1.msra.mxu0 0.0
      %325 = vmatprep.subr.mxu0 0.0
      %326 = vmatpush1.msra.mxu0 0.0
      %327 = vmatprep.subr.mxu0 0.0
      %328 = vmatpush1.msra.mxu0 0.0
      %329 = vmatprep.subr.mxu0 0.0
      %330 = vmatpush1.msra.mxu0 0.0
      %331 = vmatprep.subr.mxu0 0.0
      %332 = vmatpush1.msra.mxu0 0.0
      %333 = vmatprep.subr.mxu0 0.0
      %334 = vmatpush1.msra.mxu0 0.0
      %335 = vmatprep.subr.mxu0 0.0
      %336 = vmatpush1.msra.mxu0 0.0
      %337 = vmatprep.subr.mxu0 0.0
      %338 = vmatpush1.msra.mxu0 0.0
      %339 = vmatprep.subr.mxu0 0.0
      %340 = vmatpush1.msra.mxu0 0.0
      %341 = vmatprep.subr.mxu0 0.0
      %342 = vmatpush1.msra.mxu0 0.0
      %343 = vmatprep.subr.mxu0 0.0
      %344 = vmatpush1.msra.mxu0 0.0
      %345 = vmatprep.subr.mxu0 0.0
      %346 = vmatpush1.msra.mxu0 0.0
      %347 = vmatprep.subr.mxu0 0.0
      %348 = vmatpush1.msra.mxu0 0.0
      %349 = vmatprep.subr.mxu0 0.0
      %350 = vmatpush1.msra.mxu0 0.0
      %351 = vmatprep.subr.mxu0 0.0
      %352 = vmatpush1.msra.mxu0 0.0
      %353 = vmatprep.subr.mxu0 0.0
      %354 = vmatpush1.msra.mxu0 0.0
      %355 = vmatprep.subr.mxu0 0.0
      %356 = vmatpush1.msra.mxu0 0.0
      %357 = vmatprep.subr.mxu0 0.0
      %358 = vmatpush1.msra.mxu0 0.0
      %359 = vmatprep.subr.mxu0 0.0
      %360 = vmatpush1.msra.mxu0 0.0
      %361 = vmatprep.subr.mxu0 0.0
      %362 = vmatpush1.msra.mxu0 0.0
      %363 = vmatprep.subr.mxu0 0.0
      %364 = vmatpush1.msra.mxu0 0.0
      %365 = vmatprep.subr.mxu0 0.0
      %366 = vmatpush1.msra.mxu0 0.0
      %367 = vmatprep.subr.mxu0 0.0
      %368 = vmatpush1.msra.mxu0 0.0
      %369 = vmatprep.subr.mxu0 0.0
      %370 = vmatpush1.msra.mxu0 0.0
      %371 = vmatprep.subr.mxu0 0.0
      %372 = vmatpush1.msra.mxu0 0.0
      %373 = vmatprep.subr.mxu0 0.0
      %374 = vmatpush1.msra.mxu0 0.0
      %375 = vmatprep.subr.mxu0 0.0
      %376 = vmatpush1.msra.mxu0 0.0
      %377 = vmatprep.subr.mxu0 0.0
      %378 = vmatpush1.msra.mxu0 0.0
      %379 = vmatprep.subr.mxu0 0.0
      %380 = vmatpush1.msra.mxu0 0.0
      %381 = vmatprep.mubr.f32.mxu0 0.0
      %382 = vmatmul.mubr.f32.gmra.mrb[0].mxu0 %v312
      %v383 = vpop.f32.mrb[0].mxu0
      %v384 = vadd.f32 %v303, %v383
      %v385 = vpop.f32.mrb[0].mxu0
      %386 = vmatprep.mubr.f32.mxu0 0.0
      %387 = vmatmul.mubr.f32.gmra.mrb[0].mxu0 %v315
      %v388 = vpop.f32.mrb[0].mxu0
      %v389 = vadd.f32 %v308, %v388
      %v390 = vpop.f32.mrb[0].mxu0
      %391 = vdwg.mxu0
      %v393 = vsel %vm229, %v221, 0
      %v396 = vsel %vm229, %v226, 0
      %398 = vmatprep.subr.mxu0 0.0
      %399 = vmatpush1.msra.mxu0 %v19
      %400 = vmatprep.subr.mxu0 0.0
      %401 = vmatpush1.msra.mxu0 0.0
      %402 = vmatprep.subr.mxu0 0.0
      %403 = vmatpush1.msra.mxu0 0.0
      %404 = vmatprep.subr.mxu0 0.0
      %405 = vmatpush1.msra.mxu0 0.0
      %406 = vmatprep.subr.mxu0 0.0
      %407 = vmatpush1.msra.mxu0 0.0
      %408 = vmatprep.subr.mxu0 0.0
      %409 = vmatpush1.msra.mxu0 0.0
      %410 = vmatprep.subr.mxu0 0.0
      %411 = vmatpush1.msra.mxu0 0.0
      %412 = vmatprep.subr.mxu0 0.0
      %413 = vmatpush1.msra.mxu0 0.0
      %414 = vmatprep.subr.mxu0 0.0
      %415 = vmatpush1.msra.mxu0 0.0
      %416 = vmatprep.subr.mxu0 0.0
      %417 = vmatpush1.msra.mxu0 0.0
      %418 = vmatprep.subr.mxu0 0.0
      %419 = vmatpush1.msra.mxu0 0.0
      %420 = vmatprep.subr.mxu0 0.0
      %421 = vmatpush1.msra.mxu0 0.0
      %422 = vmatprep.subr.mxu0 0.0
      %423 = vmatpush1.msra.mxu0 0.0
      %424 = vmatprep.subr.mxu0 0.0
      %425 = vmatpush1.msra.mxu0 0.0
      %426 = vmatprep.subr.mxu0 0.0
      %427 = vmatpush1.msra.mxu0 0.0
      %428 = vmatprep.subr.mxu0 0.0
      %429 = vmatpush1.msra.mxu0 0.0
      %430 = vmatprep.subr.mxu0 0.0
      %431 = vmatpush1.msra.mxu0 0.0
      %432 = vmatprep.subr.mxu0 0.0
      %433 = vmatpush1.msra.mxu0 0.0
      %434 = vmatprep.subr.mxu0 0.0
      %435 = vmatpush1.msra.mxu0 0.0
      %436 = vmatprep.subr.mxu0 0.0
      %437 = vmatpush1.msra.mxu0 0.0
      %438 = vmatprep.subr.mxu0 0.0
      %439 = vmatpush1.msra.mxu0 0.0
      %440 = vmatprep.subr.mxu0 0.0
      %441 = vmatpush1.msra.mxu0 0.0
      %442 = vmatprep.subr.mxu0 0.0
      %443 = vmatpush1.msra.mxu0 0.0
      %444 = vmatprep.subr.mxu0 0.0
      %445 = vmatpush1.msra.mxu0 0.0
      %446 = vmatprep.subr.mxu0 0.0
      %447 = vmatpush1.msra.mxu0 0.0
      %448 = vmatprep.subr.mxu0 0.0
      %449 = vmatpush1.msra.mxu0 0.0
      %450 = vmatprep.subr.mxu0 0.0
      %451 = vmatpush1.msra.mxu0 0.0
      %452 = vmatprep.subr.mxu0 0.0
      %453 = vmatpush1.msra.mxu0 0.0
      %454 = vmatprep.subr.mxu0 0.0
      %455 = vmatpush1.msra.mxu0 0.0
      %456 = vmatprep.subr.mxu0 0.0
      %457 = vmatpush1.msra.mxu0 0.0
      %458 = vmatprep.subr.mxu0 0.0
      %459 = vmatpush1.msra.mxu0 0.0
      %460 = vmatprep.subr.mxu0 0.0
      %461 = vmatpush1.msra.mxu0 0.0
      %462 = vmatprep.mubr.f32.mxu0 0.0
      %463 = vmatmul.mubr.f32.gmra.mrb[0].mxu0 %v393
      %v464 = vpop.f32.mrb[0].mxu0
      %v465 = vadd.f32 0.0, %v464
      %v466 = vpop.f32.mrb[0].mxu0
      %467 = vmatprep.mubr.f32.mxu0 0.0
      %468 = vmatmul.mubr.f32.gmra.mrb[0].mxu0 %v396
      %v469 = vpop.f32.mrb[0].mxu0
      %v470 = vadd.f32 0.0, %v469
      %v471 = vpop.f32.mrb[0].mxu0
      %472 = vdwg.mxu0
      %v473 = vadd.f32 %v384, %v465
      %v474 = vadd.f32 %v389, %v470
      %v475 = vadd.f32 %v473, %v20
      %v476 = vadd.f32 %v474, %v21
      %s477 = scalar_lea.vmem [#allocation2], %s62
      %vm478 = vcmask 261120
      %479 = vst.msk [vmem:[%s477] sm:$0xff] %vm478, %v475
      %480 = vst.msk [vmem:[%s477 + $0x8] sm:$0xff] %vm478, %v476
    $region18: #{tpu_custom_call.1} parent=1 // loop_footer
      %s61 = sadd.s32 1, %s57
    $region19: #{tpu_custom_call.1} parent=1 // loop_footer_branch
      %56 = sbr.rel target = $region15
    $region20: #{tpu_custom_call.1} parent=1 // loop_exit
      _
    // Predicated region
    $region21: #{tpu_custom_call.1} parent=1 // pred_check
      _
    $region22: #{tpu_custom_call.1} parent=1 // pred_check_branch
      %482 = sbr.rel (0) target = $region24
    $region23: #{tpu_custom_call.1} parent=1 // pred_region
      %s484 = ssub.s32 512, 512
      %485 = vsyncadd [#allocation3], %s484
      %s486 = sshll.u32 [#allocation2], 4
      %s487 = int_to_ptr.vmem [resolvable:$true] %s486
      %492 = dma.vmem_to_hbm [thread:$0]  %s487, 512, %s3, [#allocation3], 128, 128, 8
    $region24: #{tpu_custom_call.1} parent=1 // pred_fallthru
      _
    // Predicated region
    $region25: #{tpu_custom_call.1} parent=1 // pred_check
      _
    $region26: #{tpu_custom_call.1} parent=1 // pred_check_branch
      %494 = sbr.rel (0) target = $region28
    $region27: #{tpu_custom_call.1} parent=1 // pred_region
      %495 = dma.done [#allocation3], 512
    $region28: #{tpu_custom_call.1} parent=1 // pred_fallthru
      _
    %496 = vsyncpa [#allocation3], 1

</llo_original>
